<compile_context>
chip_gen: v6e
topology: v6e:2x2x1
jax: 0.10.0
libtpu: 0.0.40
codegen_flags: <defaults>
</compile_context>

<pallas_src>
import jax
import jax.numpy as jnp
from jax.experimental import pallas as pl
from jax.experimental.pallas import tpu as pltpu

LANE = 128  # TPU vreg lane width


def mlp_kernel(x_ref, w1_ref, b1_ref, w2_ref, b2_ref, o_ref):
    """out = relu(x @ W1 + b1) @ W2p + b2p, fully fused in VMEM/vregs."""
    x = x_ref[...]
    # hidden = relu(x @ W1 + b1)   (b1 is (1, n_hidden) -> broadcast add)
    h = jnp.dot(x, w1_ref[...], preferred_element_type=jnp.float32)
    h = jnp.maximum(h + b1_ref[...], 0.0)
    # out = hidden @ W2p + b2p     (W2p/b2p are lane-padded to a 128 multiple)
    out = jnp.dot(h, w2_ref[...], preferred_element_type=jnp.float32)
    out = out + b2_ref[...]
    o_ref[...] = out.astype(o_ref.dtype)


def prepare_params(w1, b1, w2, b2):
    """One-time parameter prep (NOT in the per-call path).

    - b1/b2 reshaped to (1, N) so the kernel gets direct broadcastable refs.
    - W2/b2 padded to a multiple of 128 output columns for lane-dense stores.
    Returns (params_tuple, n_output).
    """
    n_output = w2.shape[1]
    n_out_pad = ((n_output + LANE - 1) // LANE) * LANE
    pad = n_out_pad - n_output
    w2p = jnp.pad(w2, ((0, 0), (0, pad)))
    b2p = jnp.pad(b2, ((0, pad),))[None, :]
    return (w1, b1[None, :], w2p, b2p), n_output


def net_forward(x, params, n_output, *, tile_b=256):
    """Pallas MLP forward.  `params` comes from prepare_params().

    Small batches: single gridless call, whole arrays resident in VMEM.
    Large batches (multiple of tile_b): batch-tiled grid, batch axis marked
    "parallel" so v7x megacore shards it across both TensorCores.
    """
    w1, b1, w2p, b2p = params
    batch, n_feature = x.shape
    n_out_pad = w2p.shape[1]
    out_shape = jax.ShapeDtypeStruct((batch, n_out_pad), x.dtype)

    if batch >= tile_b and batch % tile_b == 0:
        # Batched grid path: amortize launch cost, lane-dense tiled stores.
        def full(shape):
            return pl.BlockSpec(shape, lambda i: (0, 0))

        out_p = pl.pallas_call(
            mlp_kernel,
            out_shape=out_shape,
            grid=(batch // tile_b,),
            in_specs=[
                pl.BlockSpec((tile_b, n_feature), lambda i: (i, 0)),
                full(w1.shape),
                full(b1.shape),
                full(w2p.shape),
                full(b2p.shape),
            ],
            out_specs=pl.BlockSpec((tile_b, n_out_pad), lambda i: (i, 0)),
            compiler_params=pltpu.CompilerParams(
                dimension_semantics=("parallel",)),
        )(x, w1, b1, w2p, b2p)
    else:
        # Gridless path for tiny batches: no pipeline prologue/epilogue.
        def vmem():
            return pl.BlockSpec(memory_space=pltpu.MemorySpace.VMEM)

        out_p = pl.pallas_call(
            mlp_kernel,
            out_shape=out_shape,
            in_specs=[vmem() for _ in range(5)],
            out_specs=vmem(),
        )(x, w1, b1, w2p, b2p)

    # Drop the lane padding; kernel-side store stays unmasked / lane-dense.
    return out_p[:, :n_output]


if __name__ == "__main__":
    # Net(n_feature=4, n_hidden=32, n_output=2), batch=8 (small demo shapes).
    n_feature, n_hidden, n_output, batch = 4, 32, 2, 8

    key = jax.random.PRNGKey(0)
    kx, kw1, kb1, kw2, kb2, kx2 = jax.random.split(key, 6)

    x = jax.random.normal(kx, (batch, n_feature), dtype=jnp.float32)

    # PyTorch-style uniform init; weights stored as [in, out] so the kernel
    # computes x @ W (equivalent to Linear's x @ W.T with W = [out, in]).
    bound1 = 1.0 / (n_feature ** 0.5)
    w1 = jax.random.uniform(kw1, (n_feature, n_hidden), jnp.float32, -bound1, bound1)
    b1 = jax.random.uniform(kb1, (n_hidden,), jnp.float32, -bound1, bound1)
    bound2 = 1.0 / (n_hidden ** 0.5)
    w2 = jax.random.uniform(kw2, (n_hidden, n_output), jnp.float32, -bound2, bound2)
    b2 = jax.random.uniform(kb2, (n_output,), jnp.float32, -bound2, bound2)

    # One-time prep (bias reshape + lane padding) outside the per-call path.
    params, n_out = prepare_params(w1, b1, w2, b2)

    def ref_fn(xi):
        return jnp.maximum(xi @ w1 + b1, 0.0) @ w2 + b2

    # 1) Small-batch gridless path.
    out = net_forward(x, params, n_out)
    jax.block_until_ready(out)
    assert out.shape == (batch, n_output)
    assert jnp.allclose(out, ref_fn(x), atol=1e-5, rtol=1e-5)

    # 2) Batched grid path (parallel batch axis) — correctness check.
    big_batch = 512
    xb = jax.random.normal(kx2, (big_batch, n_feature), dtype=jnp.float32)
    out_b = net_forward(xb, params, n_out, tile_b=256)
    jax.block_until_ready(out_b)
    assert out_b.shape == (big_batch, n_output)
    assert jnp.allclose(out_b, ref_fn(xb), atol=1e-5, rtol=1e-5)

    print("KERNEL_OK")
</pallas_src>

<mosaic_0001>
module attributes {stable_mosaic.version = 11 : i64} {
  func.func @mlp_kernel(%arg0: memref<8x4xf32, #tpu.memory_space<vmem>>, %arg1: memref<4x32xf32, #tpu.memory_space<vmem>>, %arg2: memref<1x32xf32, #tpu.memory_space<vmem>>, %arg3: memref<32x128xf32, #tpu.memory_space<vmem>>, %arg4: memref<1x128xf32, #tpu.memory_space<vmem>>, %arg5: memref<8x128xf32, #tpu.memory_space<vmem>>) attributes {dimension_semantics = [], scalar_prefetch = 0 : i64, scratch_operands = 0 : i64, tpu.core_type = #tpu.core_type<tc>} {
    %c0 = arith.constant 0 : index
    %c0_0 = arith.constant 0 : index
    %0 = vector.load %arg0[%c0, %c0_0] : memref<8x4xf32, #tpu.memory_space<vmem>>, vector<8x4xf32>
    %c0_1 = arith.constant 0 : index
    %c0_2 = arith.constant 0 : index
    %1 = vector.load %arg1[%c0_1, %c0_2] : memref<4x32xf32, #tpu.memory_space<vmem>>, vector<4x32xf32>
    %cst = arith.constant dense<0.000000e+00> : vector<8x32xf32>
    %2 = tpu.matmul %0, %1, %cst {dimension_numbers = #tpu.dot_dimension_numbers<[1], [0], [0], [1], [0, 0, 1, 1], [], []>} : vector<8x4xf32>, vector<4x32xf32>, vector<8x32xf32> -> vector<8x32xf32>
    %c0_3 = arith.constant 0 : index
    %c0_4 = arith.constant 0 : index
    %3 = vector.load %arg2[%c0_3, %c0_4] : memref<1x32xf32, #tpu.memory_space<vmem>>, vector<1x32xf32>
    %4 = vector.broadcast %3 : vector<1x32xf32> to vector<8x32xf32>
    %5 = arith.addf %2, %4 : vector<8x32xf32>
    %cst_5 = arith.constant 0.000000e+00 : f32
    %6 = vector.broadcast %cst_5 : f32 to vector<8x32xf32>
    %7 = arith.maximumf %5, %6 : vector<8x32xf32>
    %c0_6 = arith.constant 0 : index
    %c0_7 = arith.constant 0 : index
    %8 = vector.load %arg3[%c0_6, %c0_7] : memref<32x128xf32, #tpu.memory_space<vmem>>, vector<32x128xf32>
    %cst_8 = arith.constant dense<0.000000e+00> : vector<8x128xf32>
    %9 = tpu.matmul %7, %8, %cst_8 {dimension_numbers = #tpu.dot_dimension_numbers<[1], [0], [0], [1], [0, 0, 1, 1], [], []>} : vector<8x32xf32>, vector<32x128xf32>, vector<8x128xf32> -> vector<8x128xf32>
    %c0_9 = arith.constant 0 : index
    %c0_10 = arith.constant 0 : index
    %10 = vector.load %arg4[%c0_9, %c0_10] : memref<1x128xf32, #tpu.memory_space<vmem>>, vector<1x128xf32>
    %11 = vector.broadcast %10 : vector<1x128xf32> to vector<8x128xf32>
    %12 = arith.addf %9, %11 : vector<8x128xf32>
    %c0_11 = arith.constant 0 : index
    %c0_12 = arith.constant 0 : index
    %13 = vector.load %arg5[%c0_11, %c0_12] : memref<8x128xf32, #tpu.memory_space<vmem>>, vector<8x128xf32>
    tpu.vector_store %arg5[%c0_11, %c0_12], %12 {strides = array<i32>} : memref<8x128xf32, #tpu.memory_space<vmem>>, vector<8x128xf32>,
    return
  }
}

</mosaic_0001>

<llo_original>
// kernel: tpu_custom_call.1
$region0: #{tpu_custom_call.1}
  #allocation0 [shape = 'u32[]', space=smem, size = 0x4, offset = 0x4, fixed_abs, tag = 'smem constant byte address 0x4 - core index']
  #allocation1 [shape = 'u32[144,128]{1,0:T(1,128)}', space=vmem, size = 0x12000, scoped, tag = 'internal scratch']
  %s0 = inlined_call_operand.vmem [shape: f32[8,4], index: 0, kind: input, shape index: {}]
  %s1 = inlined_call_operand.vmem [shape: f32[4,32], index: 1, kind: input, shape index: {}]
  %s2 = inlined_call_operand.vmem [shape: f32[1,32], index: 2, kind: input, shape index: {}]
  %s3 = inlined_call_operand.hbm [shape: f32[32,128], index: 3, kind: input, shape index: {}]
  %s4 = inlined_call_operand.vmem [shape: f32[1,128], index: 4, kind: input, shape index: {}]
  %s5 = inlined_call_operand.hbm [shape: f32[8,128], index: 5, kind: output, shape index: {}]
  %s6 = sld [smem:[#allocation0]]
  $region34: #{tpu_custom_call.1} parent=0
    _
  %s8 = ssub.s32 1, %s6
  %s9 = scalar_select 0, %s8, %s6
  $region1: #{tpu_custom_call.1} parent=0
    #allocation2 [shape = 'u8[16384]{0}', space=vmem, size = 0x4000, scoped, tag = 'input window, operand 3, single buffered']
    #allocation3 [shape = 's32[1]{0}', space=sflag, size = 0x4, scoped, tag = 'scoped memory for tpu_custom_call.1']
    #allocation4 [shape = 's32[1]{0}', space=sflag, size = 0x4, scoped, tag = 'scoped memory for tpu_custom_call.1']
    #allocation5 [shape = 'u8[4096]{0}', space=vmem, size = 0x1000, scoped, tag = 'output window, operand 0, single buffered']
    %10 = vsyncpa [#allocation3], 0
    %11 = vsyncpa [#allocation4], 0
    // Predicated region
    $region2: #{tpu_custom_call.1} parent=1 // pred_check
      _
    $region3: #{tpu_custom_call.1} parent=1 // pred_check_branch
      %13 = sbr.rel (0) target = $region5
    $region4: #{tpu_custom_call.1} parent=1 // pred_region
      _
    $region5: #{tpu_custom_call.1} parent=1 // pred_fallthru
      _
    // Predicated region
    $region6: #{tpu_custom_call.1} parent=1 // pred_check
      _
    $region7: #{tpu_custom_call.1} parent=1 // pred_check_branch
      %15 = sbr.rel (0) target = $region9
    $region8: #{tpu_custom_call.1} parent=1 // pred_region
      _
    $region9: #{tpu_custom_call.1} parent=1 // pred_fallthru
      _
    // Predicated region
    $region10: #{tpu_custom_call.1} parent=1 // pred_check
      _
    $region11: #{tpu_custom_call.1} parent=1 // pred_check_branch
      %17 = sbr.rel (0) target = $region13
    $region12: #{tpu_custom_call.1} parent=1 // pred_region
      _
    $region13: #{tpu_custom_call.1} parent=1 // pred_fallthru
      _
    // Predicated region
    $region14: #{tpu_custom_call.1} parent=1 // pred_check
      _
    $region15: #{tpu_custom_call.1} parent=1 // pred_check_branch
      %19 = sbr.rel (0) target = $region17
    $region16: #{tpu_custom_call.1} parent=1 // pred_region
      %s21 = ssub.s32 512, 512
      %22 = vsyncadd [#allocation3], %s21
      %s23 = sshll.u32 [#allocation2], 4
      %s24 = int_to_ptr.vmem [resolvable:$true] %s23
      %29 = dma.hbm_to_vmem [thread:$0]  %s3, 512, %s24, [#allocation3], 128, 128, 8
    $region17: #{tpu_custom_call.1} parent=1 // pred_fallthru
      _
    // Predicated region
    $region18: #{tpu_custom_call.1} parent=1 // pred_check
      _
    $region19: #{tpu_custom_call.1} parent=1 // pred_check_branch
      %31 = sbr.rel (0) target = $region21
    $region20: #{tpu_custom_call.1} parent=1 // pred_region
      _
    $region21: #{tpu_custom_call.1} parent=1 // pred_fallthru
      _
    // Predicated region
    $region22: #{tpu_custom_call.1} parent=1 // pred_check
      _
    $region23: #{tpu_custom_call.1} parent=1 // pred_check_branch
      %33 = sbr.rel (0) target = $region25
    $region24: #{tpu_custom_call.1} parent=1 // pred_region
      %34 = dma.done [#allocation3], 512
    $region25: #{tpu_custom_call.1} parent=1 // pred_fallthru
      _
    %v35 = vld [vmem:[%s0] sm:$0xff]
    %v36 = vld [vmem:[%s1] sm:$0xf]
    %v37 = vld [vmem:[%s2] sm:$0x1]
    %v39 = vlaneseq
    %v40 = vshrl.u32 %v39, 7
    %v41 = vsub.s32 0, %v40
    %v42 = vrot.slane %v37, %v41
    %vm44 = vcmask 31744
    %v46 = vsel %vm44, %v35, 0
    %vm48 = vcmask 1043456
    %v50 = vsel %vm48, %v36, 0
    %52 = vmatprep.subr.mxu0 0.0
    %53 = vmatpush1.msra.mxu0 0.0
    %54 = vmatprep.subr.mxu0 0.0
    %55 = vmatpush1.msra.mxu0 0.0
    %56 = vmatprep.subr.mxu0 0.0
    %57 = vmatpush1.msra.mxu0 0.0
    %58 = vmatprep.subr.mxu0 0.0
    %59 = vmatpush1.msra.mxu0 0.0
    %60 = vmatprep.subr.mxu0 0.0
    %61 = vmatpush1.msra.mxu0 0.0
    %62 = vmatprep.subr.mxu0 0.0
    %63 = vmatpush1.msra.mxu0 0.0
    %64 = vmatprep.subr.mxu0 0.0
    %65 = vmatpush1.msra.mxu0 0.0
    %66 = vmatprep.subr.mxu0 0.0
    %67 = vmatpush1.msra.mxu0 0.0
    %68 = vmatprep.subr.mxu0 0.0
    %69 = vmatpush1.msra.mxu0 0.0
    %70 = vmatprep.subr.mxu0 0.0
    %71 = vmatpush1.msra.mxu0 0.0
    %72 = vmatprep.subr.mxu0 0.0
    %73 = vmatpush1.msra.mxu0 0.0
    %74 = vmatprep.subr.mxu0 0.0
    %75 = vmatpush1.msra.mxu0 0.0
    %76 = vmatprep.subr.mxu0 0.0
    %77 = vmatpush1.msra.mxu0 0.0
    %78 = vmatprep.subr.mxu0 0.0
    %79 = vmatpush1.msra.mxu0 0.0
    %80 = vmatprep.subr.mxu0 0.0
    %81 = vmatpush1.msra.mxu0 0.0
    %82 = vmatprep.subr.mxu0 0.0
    %83 = vmatpush1.msra.mxu0 %v50
    %84 = vmatprep.subr.mxu0 0.0
    %85 = vmatpush2.msra.mxu0 0.0
    %86 = vmatprep.subr.mxu0 0.0
    %87 = vmatpush2.msra.mxu0 0.0
    %88 = vmatprep.subr.mxu0 0.0
    %89 = vmatpush2.msra.mxu0 0.0
    %90 = vmatprep.subr.mxu0 0.0
    %91 = vmatpush2.msra.mxu0 0.0
    %92 = vmatprep.subr.mxu0 0.0
    %93 = vmatpush2.msra.mxu0 0.0
    %94 = vmatprep.subr.mxu0 0.0
    %95 = vmatpush2.msra.mxu0 0.0
    %96 = vmatprep.subr.mxu0 0.0
    %97 = vmatpush2.msra.mxu0 0.0
    %98 = vmatprep.subr.mxu0 0.0
    %99 = vmatpush2.msra.mxu0 0.0
    %100 = vmatprep.subr.mxu0 0.0
    %101 = vmatpush2.msra.mxu0 0.0
    %102 = vmatprep.subr.mxu0 0.0
    %103 = vmatpush2.msra.mxu0 0.0
    %104 = vmatprep.subr.mxu0 0.0
    %105 = vmatpush2.msra.mxu0 0.0
    %106 = vmatprep.subr.mxu0 0.0
    %107 = vmatpush2.msra.mxu0 0.0
    %108 = vmatprep.subr.mxu0 0.0
    %109 = vmatpush2.msra.mxu0 0.0
    %110 = vmatprep.subr.mxu0 0.0
    %111 = vmatpush2.msra.mxu0 0.0
    %112 = vmatprep.subr.mxu0 0.0
    %113 = vmatpush2.msra.mxu0 0.0
    %114 = vmatprep.subr.mxu0 0.0
    %115 = vmatpush2.msra.mxu0 0.0
    %116 = vmatprep.mubr.f32.mxu0 0.0
    %117 = vmatmul.mubr.f32.gmra.mxu0 %v46
    %v118 = vpop.f32.mrf.mxu0
    %v119 = vadd.f32 %v42, %v118
    %v120 = vpop.f32.mrf.mxu0
    %121 = vdwg.mxu0
    %v122 = vmax.f32 %v119, 0.0
    %v123 = vld [vmem:[#allocation2] sm:$0xff]
    %v124 = vld [vmem:[#allocation2 + $0x8] sm:$0xff]
    %v125 = vld [vmem:[#allocation2 + $0x10] sm:$0xff]
    %v126 = vld [vmem:[#allocation2 + $0x18] sm:$0xff]
    %v127 = vld [vmem:[%s4] sm:$0x1]
    %v129 = vlaneseq
    %v130 = vshrl.u32 %v129, 7
    %v131 = vsub.s32 0, %v130
    %v132 = vrot.slane %v127, %v131
    %vm134 = vcmask 261120
    %v136 = vsel %vm134, %v122, 0
    %138 = vmatprep.subr.mxu0 0.0
    %139 = vmatpush1.msra.mxu0 0.0
    %140 = vmatprep.subr.mxu0 0.0
    %141 = vmatpush1.msra.mxu0 0.0
    %142 = vmatprep.subr.mxu0 0.0
    %143 = vmatpush1.msra.mxu0 0.0
    %144 = vmatprep.subr.mxu0 0.0
    %145 = vmatpush1.msra.mxu0 0.0
    %146 = vmatprep.subr.mxu0 0.0
    %147 = vmatpush1.msra.mxu0 0.0
    %148 = vmatprep.subr.mxu0 0.0
    %149 = vmatpush1.msra.mxu0 0.0
    %150 = vmatprep.subr.mxu0 0.0
    %151 = vmatpush1.msra.mxu0 0.0
    %152 = vmatprep.subr.mxu0 0.0
    %153 = vmatpush1.msra.mxu0 0.0
    %154 = vmatprep.subr.mxu0 0.0
    %155 = vmatpush1.msra.mxu0 0.0
    %156 = vmatprep.subr.mxu0 0.0
    %157 = vmatpush1.msra.mxu0 0.0
    %158 = vmatprep.subr.mxu0 0.0
    %159 = vmatpush1.msra.mxu0 0.0
    %160 = vmatprep.subr.mxu0 0.0
    %161 = vmatpush1.msra.mxu0 0.0
    %162 = vmatprep.subr.mxu0 0.0
    %163 = vmatpush1.msra.mxu0 %v126
    %164 = vmatprep.subr.mxu0 0.0
    %165 = vmatpush1.msra.mxu0 %v125
    %166 = vmatprep.subr.mxu0 0.0
    %167 = vmatpush1.msra.mxu0 %v124
    %168 = vmatprep.subr.mxu0 0.0
    %169 = vmatpush1.msra.mxu0 %v123
    %170 = vmatprep.subr.mxu0 0.0
    %171 = vmatpush2.msra.mxu0 0.0
    %172 = vmatprep.subr.mxu0 0.0
    %173 = vmatpush2.msra.mxu0 0.0
    %174 = vmatprep.subr.mxu0 0.0
    %175 = vmatpush2.msra.mxu0 0.0
    %176 = vmatprep.subr.mxu0 0.0
    %177 = vmatpush2.msra.mxu0 0.0
    %178 = vmatprep.subr.mxu0 0.0
    %179 = vmatpush2.msra.mxu0 0.0
    %180 = vmatprep.subr.mxu0 0.0
    %181 = vmatpush2.msra.mxu0 0.0
    %182 = vmatprep.subr.mxu0 0.0
    %183 = vmatpush2.msra.mxu0 0.0
    %184 = vmatprep.subr.mxu0 0.0
    %185 = vmatpush2.msra.mxu0 0.0
    %186 = vmatprep.subr.mxu0 0.0
    %187 = vmatpush2.msra.mxu0 0.0
    %188 = vmatprep.subr.mxu0 0.0
    %189 = vmatpush2.msra.mxu0 0.0
    %190 = vmatprep.subr.mxu0 0.0
    %191 = vmatpush2.msra.mxu0 0.0
    %192 = vmatprep.subr.mxu0 0.0
    %193 = vmatpush2.msra.mxu0 0.0
    %194 = vmatprep.subr.mxu0 0.0
    %195 = vmatpush2.msra.mxu0 0.0
    %196 = vmatprep.subr.mxu0 0.0
    %197 = vmatpush2.msra.mxu0 0.0
    %198 = vmatprep.subr.mxu0 0.0
    %199 = vmatpush2.msra.mxu0 0.0
    %200 = vmatprep.subr.mxu0 0.0
    %201 = vmatpush2.msra.mxu0 0.0
    %202 = vmatprep.mubr.f32.mxu0 0.0
    %203 = vmatmul.mubr.f32.gmra.mxu0 %v136
    %v204 = vpop.f32.mrf.mxu0
    %v205 = vadd.f32 %v132, %v204
    %v206 = vpop.f32.mrf.mxu0
    %207 = vdwg.mxu0
    %208 = vst [vmem:[#allocation5] sm:$0xff] %v205
    // Predicated region
    $region26: #{tpu_custom_call.1} parent=1 // pred_check
      _
    $region27: #{tpu_custom_call.1} parent=1 // pred_check_branch
      %210 = sbr.rel (0) target = $region29
    $region28: #{tpu_custom_call.1} parent=1 // pred_region
      %s212 = ssub.s32 128, 128
      %213 = vsyncadd [#allocation4], %s212
      %s215 = sshll.u32 [#allocation5], 4
      %s216 = int_to_ptr.vmem [resolvable:$true] %s215
      %218 = dma.vmem_to_hbm [thread:$0]  %s216, 128, %s5, [#allocation4]
    $region29: #{tpu_custom_call.1} parent=1 // pred_fallthru
      _
    // Predicated region
    $region30: #{tpu_custom_call.1} parent=1 // pred_check
      _
    $region31: #{tpu_custom_call.1} parent=1 // pred_check_branch
      %220 = sbr.rel (0) target = $region33
    $region32: #{tpu_custom_call.1} parent=1 // pred_region
      %221 = dma.done [#allocation4], 128
    $region33: #{tpu_custom_call.1} parent=1 // pred_fallthru
      _
    %222 = vsyncpa [#allocation3], 1
    %223 = vsyncpa [#allocation4], 1

</llo_original>
